<compile_context>
chip_gen: v5e
topology: v5e:2x2
jax: 0.10.0
libtpu: 0.0.40
codegen_flags: <defaults>
</compile_context>

<pallas_src>
import functools
import math

import jax
import jax.numpy as jnp
from jax.experimental import pallas as pl
from jax.experimental.pallas import tpu as pltpu

_LANES = 128
_VMEM_LIMIT_BYTES = 32 * 1024 * 1024   # requested scoped-VMEM limit (all gens)
_X_TILE_BUDGET = 16 * 1024 * 1024      # budget for the 2 double-buffered x tiles


def _round_up(n, m):
    return ((n + m - 1) // m) * m


def _choose_row_tile(n_rows, row_bytes, *, multiple, budget=_X_TILE_BUDGET):
    """Rows per batch tile.

    Large tiles amortise the ~0.35us per-grid-step overhead (the kernel is
    HBM-bound, so sub-MiB tiles leave most of the roofline on the table),
    subject to:
      * `row_bytes` is the *lane-padded* VMEM footprint of one row (last dim
        rounded up to 128 lanes) -- fixes the previous 8x under-count,
      * two double-buffered x tiles must fit `budget`,
      * keep >= 2 grid steps when possible so v7x's two TensorCores both work,
      * tile rows are a multiple of the sublane tile (8 f32 / 16 bf16) and
        never exceed the array (partial last block handled by the cdiv grid).
    """
    if n_rows <= multiple:
        return n_rows                              # single full-extent block
    tm = (budget // (2 * row_bytes)) // multiple * multiple
    tm = max(tm, multiple)
    half = _round_up(pl.cdiv(n_rows, 2), multiple)
    tm = min(tm, half, (n_rows // multiple) * multiple)
    return max(tm, multiple)


def _mlleaks_kernel(x_ref, w_ref, b_ref, o_ref, *, n_out_cols):
    """One batch tile: segmented dot of x rows with the fused weight, then
    exact sigmoid(z + bias).

    x_ref: (tm, C) tile of the (lane-dense) batch.
    w_ref: (C, g) block-diagonal segment matrix (g samples per lane row), or a
           (1, C) plain fused-weight row when g == 1.
    b_ref: (1, 1) fused bias scalar in SMEM.
    o_ref: (tm, g) per-sample probabilities.
    """
    x = x_ref[...].astype(jnp.float32)
    if n_out_cols == 1:
        # N=1 output: VPU multiply + XLU lane reduce; a 1-column MXU matmul
        # would use <1% of the MXU and is no faster in this HBM-bound regime.
        z = jnp.sum(x * w_ref[...].astype(jnp.float32), axis=-1, keepdims=True)
    else:
        # Lane-dense path: (tm, 128) @ (128, g) computes g samples per lane row
        # in one small MXU matmul, full f32 precision.
        z = jnp.dot(x, w_ref[...], preferred_element_type=jnp.float32,
                    precision=jax.lax.Precision.HIGHEST)
    z = z + b_ref[0, 0]
    # Exact sigmoid: the EUP work is fully hidden under the HBM DMA, so the
    # previous approximate reciprocal bought no wall clock, only error.
    o_ref[...] = (1.0 / (1.0 + jnp.exp(-z))).astype(o_ref.dtype)


def _affine_sigmoid(x2d, w_arr, bias, n_out_cols, *, out_dtype):
    """pallas_call wrapper: rows of `x2d` -> (rows, n_out_cols) probabilities."""
    n_rows, n_cols = x2d.shape
    itemsize = jnp.dtype(x2d.dtype).itemsize
    sublane = 16 if itemsize < 4 else 8             # bf16 needs (16,128) tiles
    row_bytes = _round_up(n_cols, _LANES) * itemsize  # lane-padded VMEM bytes
    tm = _choose_row_tile(n_rows, row_bytes, multiple=sublane)

    return pl.pallas_call(
        functools.partial(_mlleaks_kernel, n_out_cols=n_out_cols),
        # No padding of x: cdiv grid + masked partial edge block.
        grid=(pl.cdiv(n_rows, tm),),
        in_specs=[
            # Batch tiles of x: double-buffered / pipelined over the grid.
            pl.BlockSpec((tm, n_cols), lambda i: (i, 0)),
            # Fused weights: constant index_map -> stay resident in VMEM.
            pl.BlockSpec(w_arr.shape, lambda i: (0, 0)),
            # Fused bias: a single f32 scalar read from SMEM.
            pl.BlockSpec(memory_space=pltpu.MemorySpace.SMEM),
        ],
        out_specs=pl.BlockSpec((tm, n_out_cols), lambda i: (i, 0)),
        out_shape=jax.ShapeDtypeStruct((n_rows, n_out_cols), out_dtype),
        compiler_params=pltpu.CompilerParams(
            dimension_semantics=("parallel",),      # v7x: 2 TCs split the batch
            vmem_limit_bytes=_VMEM_LIMIT_BYTES,
        ),
    )(x2d, w_arr, bias)


def mlleaks_forward(x, w1, b1, w2, b2):
    """x: (B, n_in); w1: (n_in, n_hidden); b1: (1, n_hidden);
    w2: (n_hidden, 1); b2: (1, 1).  Returns (B, 1) == sigmoid((x@w1+b1)@w2+b2)."""
    B, n_in = x.shape
    f32 = jnp.float32

    # Algebraic fusion of the two bias-affine layers (no nonlinearity between).
    w_row = (w1.astype(f32) @ w2.astype(f32)).reshape(1, n_in)         # (1, n_in)
    b_fused = (b1.astype(f32) @ w2.astype(f32) + b2.astype(f32)).reshape(1, 1)

    g = _LANES // n_in if (0 < n_in < _LANES and _LANES % n_in == 0) else 1
    if g > 1 and B > 0 and B % g == 0:
        # Lane-dense fast path: pack g consecutive samples into each 128-lane
        # row (free reshape of the row-major buffer) and fold the fused weight
        # into a (128, g) block-diagonal segment matrix.
        x2d = x.reshape(B // g, _LANES)
        seg = (jnp.eye(g, dtype=f32)[:, None, :]
               * w_row.reshape(n_in)[None, :, None]).reshape(_LANES, g)
        out = _affine_sigmoid(x2d, seg, b_fused, g, out_dtype=x.dtype)
        return out.reshape(B, 1)                    # row-major == batch order

    # General path (n_in doesn't divide 128, or B not a multiple of g): keep
    # the original (B, n_in) layout so x is never copied or padded in HBM.
    # The (tm, 1) output block is only 1/n_in of the HBM traffic here, so the
    # narrow store is not worth an in-kernel sublane->lane relayout.
    return _affine_sigmoid(x, w_row, b_fused, 1, out_dtype=x.dtype)


def init_params(key, n_in, n_hidden):
    """Deterministic init matching the PyTorch module:
    - weights: xavier_uniform_(gain=1) -> U(-a, a), a = sqrt(6/(fan_in+fan_out))
    - biases : default Linear init     -> U(-1/sqrt(fan_in), 1/sqrt(fan_in))
    Stored as (in, out) for the x @ W layout."""
    k1, k2, k3, k4 = jax.random.split(key, 4)

    a1 = math.sqrt(6.0 / (n_in + n_hidden))
    w1 = jax.random.uniform(k1, (n_in, n_hidden), jnp.float32, -a1, a1)
    bb1 = 1.0 / math.sqrt(n_in)
    b1 = jax.random.uniform(k2, (1, n_hidden), jnp.float32, -bb1, bb1)

    a2 = math.sqrt(6.0 / (n_hidden + 1))
    w2 = jax.random.uniform(k3, (n_hidden, 1), jnp.float32, -a2, a2)
    bb2 = 1.0 / math.sqrt(n_hidden)
    b2 = jax.random.uniform(k4, (1, 1), jnp.float32, -bb2, bb2)

    return w1, b1, w2, b2


if __name__ == "__main__":
    # Keep all f32 matmuls (reference + wrapper weight fusion) at full MXU
    # precision so the kernel-vs-reference comparison can be tight.
    jax.config.update("jax_default_matmul_precision", "highest")

    def reference(x, w1, b1, w2, b2):
        return jax.nn.sigmoid((x @ w1 + b1) @ w2 + b2)

    # Small shapes consistent with MLLeaksModel(n_in, n_hidden, n_out);
    # n_out is unused by the forward pass, mirroring the PyTorch module.
    B, n_in, n_hidden, n_out = 96, 16, 32, 3
    key = jax.random.PRNGKey(0)
    kx, kp = jax.random.split(key)
    x = jax.random.normal(kx, (B, n_in), jnp.float32)
    w1, b1, w2, b2 = init_params(kp, n_in, n_hidden)

    fwd = jax.jit(mlleaks_forward)

    # 1) Lane-dense fast path (n_in | 128, B % 8 == 0): 12 lane rows, 2 grid
    #    steps, the second one a masked partial block.
    out = jax.block_until_ready(fwd(x, w1, b1, w2, b2))
    ref = reference(x, w1, b1, w2, b2)
    assert out.shape == (B, 1)
    assert jnp.allclose(out, ref, atol=5e-5, rtol=1e-5), \
        float(jnp.max(jnp.abs(out - ref)))

    # 2) General path: n_in does not divide 128 and B not a tile multiple.
    B2, n2_in, n2_h = 37, 10, 8
    x2 = jax.random.normal(jax.random.PRNGKey(1), (B2, n2_in), jnp.float32)
    p2 = init_params(jax.random.PRNGKey(2), n2_in, n2_h)
    out2 = jax.block_until_ready(fwd(x2, *p2))
    ref2 = reference(x2, *p2)
    assert out2.shape == (B2, 1)
    assert jnp.allclose(out2, ref2, atol=5e-5, rtol=1e-5), \
        float(jnp.max(jnp.abs(out2 - ref2)))

    # 3) Fast-path-eligible n_in but B % (128//n_in) != 0: routes to the
    #    general path, with no padding or extra HBM copy of x.
    B3 = 100
    x3 = jax.random.normal(jax.random.PRNGKey(3), (B3, n_in), jnp.float32)
    out3 = jax.block_until_ready(fwd(x3, w1, b1, w2, b2))
    ref3 = reference(x3, w1, b1, w2, b2)
    assert out3.shape == (B3, 1)
    assert jnp.allclose(out3, ref3, atol=5e-5, rtol=1e-5), \
        float(jnp.max(jnp.abs(out3 - ref3)))

    print("KERNEL_OK")
</pallas_src>

<mosaic_0001>
module attributes {stable_mosaic.version = 11 : i64} {
  func.func @_mlleaks_kernel(%arg0: i32, %arg1: memref<8x128xf32, #tpu.memory_space<vmem>>, %arg2: memref<128x8xf32, #tpu.memory_space<vmem>>, %arg3: memref<1x1xf32, #tpu.memory_space<smem>>, %arg4: memref<8x8xf32, #tpu.memory_space<vmem>>) attributes {dimension_semantics = [#tpu.dimension_semantics<parallel>], iteration_bounds = array<i64: 2>, scalar_prefetch = 0 : i64, scratch_operands = 0 : i64, tpu.core_type = #tpu.core_type<tc>, window_params = [{transform_indices = @transform_0, window_bounds = array<i64: 8, 128>}, {pipeline_mode = #tpu.pipeline_mode<synchronous>, transform_indices = @transform_1, window_bounds = array<i64: 128, 8>}, {transform_indices = @transform_2, window_bounds = array<i64: 1, 1>}, {transform_indices = @transform_3, window_bounds = array<i64: 8, 8>}]} {
    %c0 = arith.constant 0 : index
    %c0_0 = arith.constant 0 : index
    %0 = vector.load %arg1[%c0, %c0_0] : memref<8x128xf32, #tpu.memory_space<vmem>>, vector<8x128xf32>
    %c0_1 = arith.constant 0 : index
    %c0_2 = arith.constant 0 : index
    %1 = vector.load %arg2[%c0_1, %c0_2] : memref<128x8xf32, #tpu.memory_space<vmem>>, vector<128x8xf32>
    %cst = arith.constant dense<0.000000e+00> : vector<8x8xf32>
    %2 = tpu.matmul %0, %1, %cst {dimension_numbers = #tpu.dot_dimension_numbers<[1], [0], [0], [1], [0, 0, 1, 1], [], []>, precision = #tpu.contract_precision<fp32>} : vector<8x128xf32>, vector<128x8xf32>, vector<8x8xf32> -> vector<8x8xf32>
    %c0_3 = arith.constant 0 : index
    %c0_4 = arith.constant 0 : index
    %3 = memref.load %arg3[%c0_3, %c0_4] : memref<1x1xf32, #tpu.memory_space<smem>>
    %4 = vector.broadcast %3 : f32 to vector<8x8xf32>
    %5 = arith.addf %2, %4 : vector<8x8xf32>
    %cst_5 = arith.constant 0.000000e+00 : f32
    %6 = vector.broadcast %cst_5 : f32 to vector<8x8xf32>
    %7 = arith.subf %6, %5 : vector<8x8xf32>
    %8 = math.exp %7 : vector<8x8xf32>
    %cst_6 = arith.constant 1.000000e+00 : f32
    %9 = vector.broadcast %cst_6 : f32 to vector<8x8xf32>
    %10 = arith.addf %9, %8 : vector<8x8xf32>
    %cst_7 = arith.constant 1.000000e+00 : f32
    %11 = vector.broadcast %cst_7 : f32 to vector<8x8xf32>
    %12 = arith.divf %11, %10 : vector<8x8xf32>
    %c0_8 = arith.constant 0 : index
    %c0_9 = arith.constant 0 : index
    %13 = vector.load %arg4[%c0_8, %c0_9] : memref<8x8xf32, #tpu.memory_space<vmem>>, vector<8x8xf32>
    tpu.vector_store %arg4[%c0_8, %c0_9], %12 {strides = array<i32>} : memref<8x8xf32, #tpu.memory_space<vmem>>, vector<8x8xf32>,
    return
  }
  func.func @transform_0(%arg0: i32) -> (i32, i32) {
    %c0_i32 = arith.constant 0 : i32
    %c0_i32_0 = arith.constant 0 : i32
    return %arg0, %c0_i32 : i32, i32
  }
  func.func @transform_1(%arg0: i32) -> (i32, i32) {
    %c0_i32 = arith.constant 0 : i32
    %c0_i32_0 = arith.constant 0 : i32
    %c0_i32_1 = arith.constant 0 : i32
    return %c0_i32, %c0_i32_0 : i32, i32
  }
  func.func @transform_2(%arg0: i32) -> (i32, i32) {
    %c0_i32 = arith.constant 0 : i32
    %c0_i32_0 = arith.constant 0 : i32
    %c0_i32_1 = arith.constant 0 : i32
    return %c0_i32, %c0_i32_0 : i32, i32
  }
  func.func @transform_3(%arg0: i32) -> (i32, i32) {
    %c0_i32 = arith.constant 0 : i32
    %c0_i32_0 = arith.constant 0 : i32
    return %arg0, %c0_i32 : i32, i32
  }
}

</mosaic_0001>

<llo_original>
// kernel: mlleaks_forward.1
$region0: #{mlleaks_forward.1}
  #allocation0 [shape = 'u32[]', space=smem, size = 0x4, offset = 0x4, fixed_abs, tag = 'smem constant byte address 0x4 - core index']
  #allocation1 [shape = 'u32[72,128]{1,0:T(1,128)}', space=vmem, size = 0x9000, scoped, tag = 'internal scratch']
  #allocation2 [shape = 'f32[1,1]{1,0:T(1,128)S(6)}', space=smem, size = 0x200, scoped, tag = 'scoped memory for mlleaks_forward.1']
  %s0 = inlined_call_operand.vmem [shape: f32[12,128], index: 0, kind: input, shape index: {}]
  %s1 = inlined_call_operand.vmem [shape: f32[128,8], index: 1, kind: input, shape index: {}]
  %s2 = inlined_call_operand.<no memory space> [shape: f32[1,1], index: 2, kind: input, shape index: {}]
  %s3 = inlined_call_operand.vmem [shape: f32[12,8], index: 3, kind: output, shape index: {}]
  %s4 = sld [smem:[#allocation0]]
  $region45: #{mlleaks_forward.1} parent=0
    _
  %s6 = ssub.s32 1, %s4
  %s7 = scalar_select 0, %s6, %s4
  %8 = sst [smem:[#allocation2]] %s2
  loop: start=0, step=1, limit=4
  $region2: #{mlleaks_forward.1} parent=0 // loop_pre_header
    _
  $region3: #{mlleaks_forward.1} parent=0 // loop_header
    %s10 = sphi 0, %s14
    %p11 = scmp.ge.s32.totalorder %s10, 4
    %s20 = sphi 0, %s22
    %s23 = sphi 0, %s20
    %s24 = sphi 0, %s23
    %s40 = sphi 0, %s24
    %s44 = sphi 0, %s44
    %s46 = sphi 0, %s44
    %s47 = sphi 0, %s46
    %s61 = sphi 0, %s47
    %s65 = sphi 0, %s65
    %s67 = sphi 0, %s65
    %s68 = sphi 0, %s67
    %s82 = sphi 0, %s68
    %s88 = sphi 0, %s90
    %s91 = sphi 0, %s88
    %s92 = sphi 0, %s91
    %s108 = sphi 0, %s92
  $region4: #{mlleaks_forward.1} parent=0 // loop_header_branch
    %13 = sbr.rel (%p11) target = $region8
  $region5: #{mlleaks_forward.1} parent=0 // loop_body
    %s15 = ssub.s32 %s10, 1
    %s16 = ssub.s32 %s10, 2
    %s17 = sadd.s32 %s10, 1
    %s18 = ssub.s32 %s10, %s17
    %p19 = scmp.eq.s32.totalorder %s18, 0
    %s21 = sadd.s32 %s20, 1
    %s22 = scalar_select %p19, %s20, %s21
    %p25 = pneg %p19
    %p26 = scmp.eq.s32.totalorder %s10, 1
    %p27 = por %p25, %p26
    %p28 = scmp.ne.s32.totalorder %s20, %s23
    %p29 = scmp.eq.s32.totalorder %s10, 0
    %p30 = por %p28, %p29
    %p31 = scmp.ne.s32.totalorder %s20, %s23
    %p32 = scmp.eq.s32.totalorder %s15, 1
    %p33 = por %p31, %p32
    %p34 = scmp.ne.s32.totalorder %s23, %s24
    %p35 = scmp.eq.s32.totalorder %s15, 0
    %p36 = por %p34, %p35
    %p37 = scmp.ne.s32.totalorder %s23, %s24
    %p38 = scmp.eq.s32.totalorder %s16, 1
    %p39 = por %p37, %p38
    %p41 = scmp.ne.s32.totalorder %s24, %s40
    %p42 = scmp.eq.s32.totalorder %s16, 0
    %p43 = por %p41, %p42
    %s45 = sadd.s32 %s44, 1
    %p48 = scmp.eq.s32.totalorder %s10, 1
    %p49 = scmp.ne.s32.totalorder %s44, %s46
    %p50 = scmp.eq.s32.totalorder %s10, 0
    %p51 = por %p49, %p50
    %p52 = scmp.ne.s32.totalorder %s44, %s46
    %p53 = scmp.eq.s32.totalorder %s15, 1
    %p54 = por %p52, %p53
    %p55 = scmp.ne.s32.totalorder %s46, %s47
    %p56 = scmp.eq.s32.totalorder %s15, 0
    %p57 = por %p55, %p56
    %p58 = scmp.ne.s32.totalorder %s46, %s47
    %p59 = scmp.eq.s32.totalorder %s16, 1
    %p60 = por %p58, %p59
    %p62 = scmp.ne.s32.totalorder %s47, %s61
    %p63 = scmp.eq.s32.totalorder %s16, 0
    %p64 = por %p62, %p63
    %s66 = sadd.s32 %s65, 1
    %p69 = scmp.eq.s32.totalorder %s10, 1
    %p70 = scmp.ne.s32.totalorder %s65, %s67
    %p71 = scmp.eq.s32.totalorder %s10, 0
    %p72 = por %p70, %p71
    %p73 = scmp.ne.s32.totalorder %s65, %s67
    %p74 = scmp.eq.s32.totalorder %s15, 1
    %p75 = por %p73, %p74
    %p76 = scmp.ne.s32.totalorder %s67, %s68
    %p77 = scmp.eq.s32.totalorder %s15, 0
    %p78 = por %p76, %p77
    %p79 = scmp.ne.s32.totalorder %s67, %s68
    %p80 = scmp.eq.s32.totalorder %s16, 1
    %p81 = por %p79, %p80
    %p83 = scmp.ne.s32.totalorder %s68, %s82
    %p84 = scmp.eq.s32.totalorder %s16, 0
    %p85 = por %p83, %p84
    %s86 = ssub.s32 %s10, %s17
    %p87 = scmp.eq.s32.totalorder %s86, 0
    %s89 = sadd.s32 %s88, 1
    %s90 = scalar_select %p87, %s88, %s89
    %p93 = pneg %p87
    %p94 = scmp.eq.s32.totalorder %s10, 1
    %p95 = por %p93, %p94
    %p96 = scmp.ne.s32.totalorder %s88, %s91
    %p97 = scmp.eq.s32.totalorder %s10, 0
    %p98 = por %p96, %p97
    %p99 = scmp.ne.s32.totalorder %s88, %s91
    %p100 = scmp.eq.s32.totalorder %s15, 1
    %p101 = por %p99, %p100
    %p102 = scmp.ne.s32.totalorder %s91, %s92
    %p103 = scmp.eq.s32.totalorder %s15, 0
    %p104 = por %p102, %p103
    %p105 = scmp.ne.s32.totalorder %s91, %s92
    %p106 = scmp.eq.s32.totalorder %s16, 1
    %p107 = por %p105, %p106
    %p109 = scmp.ne.s32.totalorder %s92, %s108
    %p110 = scmp.eq.s32.totalorder %s16, 0
    %p111 = por %p109, %p110
    %p112 = scmp.le.s32.totalorder 1, %s10
    %p113 = scmp.lt.s32.totalorder %s10, 3
    %p114 = pnand %p112, %p113
    %p115 = pneg %p114
    // Predicated region
    $region9: #{mlleaks_forward.1} parent=5 // pred_check
      _
    $region10: #{mlleaks_forward.1} parent=5 // pred_check_branch
      %117 = sbr.rel (%p114) target = $region12
    $region11: #{mlleaks_forward.1} parent=5 // pred_region
      %s118 = ssub.s32 %s10, 1
      // Predicated region
      $region13: #{mlleaks_forward.1} parent=11 // pred_check
        %p119 = pneg %p57
      $region14: #{mlleaks_forward.1} parent=11 // pred_check_branch
        %121 = sbr.rel (%p119) target = $region16
      $region15: #{mlleaks_forward.1} parent=11 // pred_region
        _
      $region16: #{mlleaks_forward.1} parent=11 // pred_fallthru
        _
      // Predicated region
      $region17: #{mlleaks_forward.1} parent=11 // pred_check
        %p122 = pneg %p78
      $region18: #{mlleaks_forward.1} parent=11 // pred_check_branch
        %124 = sbr.rel (%p122) target = $region20
      $region19: #{mlleaks_forward.1} parent=11 // pred_region
        _
      $region20: #{mlleaks_forward.1} parent=11 // pred_fallthru
        _
    $region12: #{mlleaks_forward.1} parent=5 // pred_fallthru
      _
    %p125 = scmp.lt.s32.totalorder %s10, 2
    // Predicated region
    $region21: #{mlleaks_forward.1} parent=5 // pred_check
      %p126 = pneg %p125
    $region22: #{mlleaks_forward.1} parent=5 // pred_check_branch
      %128 = sbr.rel (%p126) target = $region24
    $region23: #{mlleaks_forward.1} parent=5 // pred_region
      // Predicated region
      $region25: #{mlleaks_forward.1} parent=23 // pred_check
        %p129 = pneg %p30
      $region26: #{mlleaks_forward.1} parent=23 // pred_check_branch
        %131 = sbr.rel (%p129) target = $region28
      $region27: #{mlleaks_forward.1} parent=23 // pred_region
        %p132 = scmp.lt.s32.totalorder %s10, 1
        %s133 = scalar_select %p132, %s10, 1
        %s134 = smul.addr %s133, 8
        %s135 = scalar_lea.vmem %s0, %s134
      $region28: #{mlleaks_forward.1} parent=23 // pred_fallthru
        _
    $region24: #{mlleaks_forward.1} parent=5 // pred_fallthru
      _
    %p136 = scmp.le.s32.totalorder 1, %s10
    %p137 = scmp.lt.s32.totalorder %s10, 3
    %p138 = pnand %p136, %p137
    %p139 = pneg %p138
    // Predicated region
    $region29: #{mlleaks_forward.1} parent=5 // pred_check
      _
    $region30: #{mlleaks_forward.1} parent=5 // pred_check_branch
      %141 = sbr.rel (%p138) target = $region32
    $region31: #{mlleaks_forward.1} parent=5 // pred_region
      %s142 = ssub.s32 %s10, 1
      %p143 = scmp.lt.s32.totalorder %s15, 1
      %s144 = scalar_select %p143, %s15, 1
      %s145 = smul.addr %s144, 8
      %s146 = scalar_lea.vmem %s0, %s145
      %p147 = pneg %p36
      %p148 = pneg %p33
      %p149 = pneg %p57
      %p150 = pneg %p54
      %p151 = pneg %p78
      %p152 = pneg %p75
      %p153 = pneg %p104
      %p154 = pneg %p101
      %p155 = scmp.lt.s32.totalorder %s15, 1
      %s156 = scalar_select %p155, %s15, 1
      %s157 = smul.addr %s156, 8
      %s158 = scalar_lea.vmem %s3, %s157
      %p159 = scmp.lt.s32.totalorder %s15, 1
      %s160 = scalar_select %p159, %s15, 1
      %s161 = smul.addr %s160, 8
      %s162 = scalar_lea.vmem %s0, %s161
      %p163 = scmp.lt.s32.totalorder %s15, 1
      %s164 = scalar_select %p163, %s15, 1
      %s165 = smul.addr %s164, 8
      %s166 = scalar_lea.vmem %s3, %s165
      %v167 = vld [vmem:[%s162] sm:$0xff]
      %v168 = vld [vmem:[%s1] sm:$0xff]
      %v169 = vld [vmem:[%s1 + $0x8] sm:$0xff]
      %v170 = vld [vmem:[%s1 + $0x10] sm:$0xff]
      %v171 = vld [vmem:[%s1 + $0x18] sm:$0xff]
      %v172 = vld [vmem:[%s1 + $0x20] sm:$0xff]
      %v173 = vld [vmem:[%s1 + $0x28] sm:$0xff]
      %v174 = vld [vmem:[%s1 + $0x30] sm:$0xff]
      %v175 = vld [vmem:[%s1 + $0x38] sm:$0xff]
      %v176 = vld [vmem:[%s1 + $0x40] sm:$0xff]
      %v177 = vld [vmem:[%s1 + $0x48] sm:$0xff]
      %v178 = vld [vmem:[%s1 + $0x50] sm:$0xff]
      %v179 = vld [vmem:[%s1 + $0x58] sm:$0xff]
      %v180 = vld [vmem:[%s1 + $0x60] sm:$0xff]
      %v181 = vld [vmem:[%s1 + $0x68] sm:$0xff]
      %v182 = vld [vmem:[%s1 + $0x70] sm:$0xff]
      %v183 = vld [vmem:[%s1 + $0x78] sm:$0xff]
      %s184 = sld [smem:[#allocation2]]
      %v185 = vstv %s184
      %v186 = vand.u32 %v183, 4294901760
      %187 = vmatpush.msra.mxu0 %v186
      %v188 = vand.u32 %v182, 4294901760
      %189 = vmatpush.msra.mxu0 %v188
      %v190 = vand.u32 %v181, 4294901760
      %191 = vmatpush.msra.mxu0 %v190
      %v192 = vand.u32 %v180, 4294901760
      %193 = vmatpush.msra.mxu0 %v192
      %v194 = vand.u32 %v179, 4294901760
      %195 = vmatpush.msra.mxu0 %v194
      %v196 = vand.u32 %v178, 4294901760
      %197 = vmatpush.msra.mxu0 %v196
      %v198 = vand.u32 %v177, 4294901760
      %199 = vmatpush.msra.mxu0 %v198
      %v200 = vand.u32 %v176, 4294901760
      %201 = vmatpush.msra.mxu0 %v200
      %v202 = vand.u32 %v175, 4294901760
      %203 = vmatpush.msra.mxu0 %v202
      %v204 = vand.u32 %v174, 4294901760
      %205 = vmatpush.msra.mxu0 %v204
      %v206 = vand.u32 %v173, 4294901760
      %207 = vmatpush.msra.mxu0 %v206
      %v208 = vand.u32 %v172, 4294901760
      %209 = vmatpush.msra.mxu0 %v208
      %v210 = vand.u32 %v171, 4294901760
      %211 = vmatpush.msra.mxu0 %v210
      %v212 = vand.u32 %v170, 4294901760
      %213 = vmatpush.msra.mxu0 %v212
      %v214 = vand.u32 %v169, 4294901760
      %215 = vmatpush.msra.mxu0 %v214
      %v216 = vand.u32 %v168, 4294901760
      %217 = vmatpush.msra.mxu0 %v216
      %v218 = vand.u32 %v167, 4294901760
      %v219 = vsub.f32 %v167, %v218
      %v220 = vand.u32 %v219, 4294901760
      %v221 = vsub.f32 %v219, %v220
      %v222 = vand.u32 %v221, 4294901760
      %223 = vmatmul.f32.gmra.mxu0 %v222
      %v224 = vpop.f32.mrf.mxu0
      %v225 = vadd.f32 %v185, %v224
      %226 = vdwg.mxu0
      %v227 = vand.u32 %v183, 4294901760
      %v228 = vsub.f32 %v183, %v227
      %v229 = vand.u32 %v228, 4294901760
      %v230 = vsub.f32 %v228, %v229
      %v231 = vand.u32 %v230, 4294901760
      %232 = vmatpush.msra.mxu0 %v231
      %v233 = vand.u32 %v182, 4294901760
      %v234 = vsub.f32 %v182, %v233
      %v235 = vand.u32 %v234, 4294901760
      %v236 = vsub.f32 %v234, %v235
      %v237 = vand.u32 %v236, 4294901760
      %238 = vmatpush.msra.mxu0 %v237
      %v239 = vand.u32 %v181, 4294901760
      %v240 = vsub.f32 %v181, %v239
      %v241 = vand.u32 %v240, 4294901760
      %v242 = vsub.f32 %v240, %v241
      %v243 = vand.u32 %v242, 4294901760
      %244 = vmatpush.msra.mxu0 %v243
      %v245 = vand.u32 %v180, 4294901760
      %v246 = vsub.f32 %v180, %v245
      %v247 = vand.u32 %v246, 4294901760
      %v248 = vsub.f32 %v246, %v247
      %v249 = vand.u32 %v248, 4294901760
      %250 = vmatpush.msra.mxu0 %v249
      %v251 = vand.u32 %v179, 4294901760
      %v252 = vsub.f32 %v179, %v251
      %v253 = vand.u32 %v252, 4294901760
      %v254 = vsub.f32 %v252, %v253
      %v255 = vand.u32 %v254, 4294901760
      %256 = vmatpush.msra.mxu0 %v255
      %v257 = vand.u32 %v178, 4294901760
      %v258 = vsub.f32 %v178, %v257
      %v259 = vand.u32 %v258, 4294901760
      %v260 = vsub.f32 %v258, %v259
      %v261 = vand.u32 %v260, 4294901760
      %262 = vmatpush.msra.mxu0 %v261
      %v263 = vand.u32 %v177, 4294901760
      %v264 = vsub.f32 %v177, %v263
      %v265 = vand.u32 %v264, 4294901760
      %v266 = vsub.f32 %v264, %v265
      %v267 = vand.u32 %v266, 4294901760
      %268 = vmatpush.msra.mxu0 %v267
      %v269 = vand.u32 %v176, 4294901760
      %v270 = vsub.f32 %v176, %v269
      %v271 = vand.u32 %v270, 4294901760
      %v272 = vsub.f32 %v270, %v271
      %v273 = vand.u32 %v272, 4294901760
      %274 = vmatpush.msra.mxu0 %v273
      %v275 = vand.u32 %v175, 4294901760
      %v276 = vsub.f32 %v175, %v275
      %v277 = vand.u32 %v276, 4294901760
      %v278 = vsub.f32 %v276, %v277
      %v279 = vand.u32 %v278, 4294901760
      %280 = vmatpush.msra.mxu0 %v279
      %v281 = vand.u32 %v174, 4294901760
      %v282 = vsub.f32 %v174, %v281
      %v283 = vand.u32 %v282, 4294901760
      %v284 = vsub.f32 %v282, %v283
      %v285 = vand.u32 %v284, 4294901760
      %286 = vmatpush.msra.mxu0 %v285
      %v287 = vand.u32 %v173, 4294901760
      %v288 = vsub.f32 %v173, %v287
      %v289 = vand.u32 %v288, 4294901760
      %v290 = vsub.f32 %v288, %v289
      %v291 = vand.u32 %v290, 4294901760
      %292 = vmatpush.msra.mxu0 %v291
      %v293 = vand.u32 %v172, 4294901760
      %v294 = vsub.f32 %v172, %v293
      %v295 = vand.u32 %v294, 4294901760
      %v296 = vsub.f32 %v294, %v295
      %v297 = vand.u32 %v296, 4294901760
      %298 = vmatpush.msra.mxu0 %v297
      %v299 = vand.u32 %v171, 4294901760
      %v300 = vsub.f32 %v171, %v299
      %v301 = vand.u32 %v300, 4294901760
      %v302 = vsub.f32 %v300, %v301
      %v303 = vand.u32 %v302, 4294901760
      %304 = vmatpush.msra.mxu0 %v303
      %v305 = vand.u32 %v170, 4294901760
      %v306 = vsub.f32 %v170, %v305
      %v307 = vand.u32 %v306, 4294901760
      %v308 = vsub.f32 %v306, %v307
      %v309 = vand.u32 %v308, 4294901760
      %310 = vmatpush.msra.mxu0 %v309
      %v311 = vand.u32 %v169, 4294901760
      %v312 = vsub.f32 %v169, %v311
      %v313 = vand.u32 %v312, 4294901760
      %v314 = vsub.f32 %v312, %v313
      %v315 = vand.u32 %v314, 4294901760
      %316 = vmatpush.msra.mxu0 %v315
      %v317 = vand.u32 %v168, 4294901760
      %v318 = vsub.f32 %v168, %v317
      %v319 = vand.u32 %v318, 4294901760
      %v320 = vsub.f32 %v318, %v319
      %v321 = vand.u32 %v320, 4294901760
      %322 = vmatpush.msra.mxu0 %v321
      %v323 = vand.u32 %v167, 4294901760
      %324 = vmatmul.f32.gmra.mxu0 %v323
      %v325 = vpop.f32.mrf.mxu0
      %v326 = vadd.f32 %v225, %v325
      %327 = vdwg.mxu0
      %v328 = vand.u32 %v183, 4294901760
      %v329 = vsub.f32 %v183, %v328
      %330 = vmatpush.msra.mxu0 %v329
      %v331 = vand.u32 %v182, 4294901760
      %v332 = vsub.f32 %v182, %v331
      %333 = vmatpush.msra.mxu0 %v332
      %v334 = vand.u32 %v181, 4294901760
      %v335 = vsub.f32 %v181, %v334
      %336 = vmatpush.msra.mxu0 %v335
      %v337 = vand.u32 %v180, 4294901760
      %v338 = vsub.f32 %v180, %v337
      %339 = vmatpush.msra.mxu0 %v338
      %v340 = vand.u32 %v179, 4294901760
      %v341 = vsub.f32 %v179, %v340
      %342 = vmatpush.msra.mxu0 %v341
      %v343 = vand.u32 %v178, 4294901760
      %v344 = vsub.f32 %v178, %v343
      %345 = vmatpush.msra.mxu0 %v344
      %v346 = vand.u32 %v177, 4294901760
      %v347 = vsub.f32 %v177, %v346
      %348 = vmatpush.msra.mxu0 %v347
      %v349 = vand.u32 %v176, 4294901760
      %v350 = vsub.f32 %v176, %v349
      %351 = vmatpush.msra.mxu0 %v350
      %v352 = vand.u32 %v175, 4294901760
      %v353 = vsub.f32 %v175, %v352
      %354 = vmatpush.msra.mxu0 %v353
      %v355 = vand.u32 %v174, 4294901760
      %v356 = vsub.f32 %v174, %v355
      %357 = vmatpush.msra.mxu0 %v356
      %v358 = vand.u32 %v173, 4294901760
      %v359 = vsub.f32 %v173, %v358
      %360 = vmatpush.msra.mxu0 %v359
      %v361 = vand.u32 %v172, 4294901760
      %v362 = vsub.f32 %v172, %v361
      %363 = vmatpush.msra.mxu0 %v362
      %v364 = vand.u32 %v171, 4294901760
      %v365 = vsub.f32 %v171, %v364
      %366 = vmatpush.msra.mxu0 %v365
      %v367 = vand.u32 %v170, 4294901760
      %v368 = vsub.f32 %v170, %v367
      %369 = vmatpush.msra.mxu0 %v368
      %v370 = vand.u32 %v169, 4294901760
      %v371 = vsub.f32 %v169, %v370
      %372 = vmatpush.msra.mxu0 %v371
      %v373 = vand.u32 %v168, 4294901760
      %v374 = vsub.f32 %v168, %v373
      %375 = vmatpush.msra.mxu0 %v374
      %v376 = vand.u32 %v167, 4294901760
      %v377 = vsub.f32 %v167, %v376
      %378 = vmatmul.f32.gmra.mxu0 %v377
      %v379 = vpop.f32.mrf.mxu0
      %v380 = vadd.f32 %v326, %v379
      %381 = vdwg.mxu0
      %v382 = vand.u32 %v183, 4294901760
      %383 = vmatpush.msra.mxu0 %v382
      %v384 = vand.u32 %v182, 4294901760
      %385 = vmatpush.msra.mxu0 %v384
      %v386 = vand.u32 %v181, 4294901760
      %387 = vmatpush.msra.mxu0 %v386
      %v388 = vand.u32 %v180, 4294901760
      %389 = vmatpush.msra.mxu0 %v388
      %v390 = vand.u32 %v179, 4294901760
      %391 = vmatpush.msra.mxu0 %v390
      %v392 = vand.u32 %v178, 4294901760
      %393 = vmatpush.msra.mxu0 %v392
      %v394 = vand.u32 %v177, 4294901760
      %395 = vmatpush.msra.mxu0 %v394
      %v396 = vand.u32 %v176, 4294901760
      %397 = vmatpush.msra.mxu0 %v396
      %v398 = vand.u32 %v175, 4294901760
      %399 = vmatpush.msra.mxu0 %v398
      %v400 = vand.u32 %v174, 4294901760
      %401 = vmatpush.msra.mxu0 %v400
      %v402 = vand.u32 %v173, 4294901760
      %403 = vmatpush.msra.mxu0 %v402
      %v404 = vand.u32 %v172, 4294901760
      %405 = vmatpush.msra.mxu0 %v404
      %v406 = vand.u32 %v171, 4294901760
      %407 = vmatpush.msra.mxu0 %v406
      %v408 = vand.u32 %v170, 4294901760
      %409 = vmatpush.msra.mxu0 %v408
      %v410 = vand.u32 %v169, 4294901760
      %411 = vmatpush.msra.mxu0 %v410
      %v412 = vand.u32 %v168, 4294901760
      %413 = vmatpush.msra.mxu0 %v412
      %v414 = vand.u32 %v167, 4294901760
      %v415 = vsub.f32 %v167, %v414
      %v416 = vand.u32 %v415, 4294901760
      %417 = vmatmul.f32.gmra.mxu0 %v416
      %v418 = vpop.f32.mrf.mxu0
      %v419 = vadd.f32 %v380, %v418
      %420 = vdwg.mxu0
      %v421 = vand.u32 %v183, 4294901760
      %v422 = vsub.f32 %v183, %v421
      %v423 = vand.u32 %v422, 4294901760
      %424 = vmatpush.msra.mxu0 %v423
      %v425 = vand.u32 %v182, 4294901760
      %v426 = vsub.f32 %v182, %v425
      %v427 = vand.u32 %v426, 4294901760
      %428 = vmatpush.msra.mxu0 %v427
      %v429 = vand.u32 %v181, 4294901760
      %v430 = vsub.f32 %v181, %v429
      %v431 = vand.u32 %v430, 4294901760
      %432 = vmatpush.msra.mxu0 %v431
      %v433 = vand.u32 %v180, 4294901760
      %v434 = vsub.f32 %v180, %v433
      %v435 = vand.u32 %v434, 4294901760
      %436 = vmatpush.msra.mxu0 %v435
      %v437 = vand.u32 %v179, 4294901760
      %v438 = vsub.f32 %v179, %v437
      %v439 = vand.u32 %v438, 4294901760
      %440 = vmatpush.msra.mxu0 %v439
      %v441 = vand.u32 %v178, 4294901760
      %v442 = vsub.f32 %v178, %v441
      %v443 = vand.u32 %v442, 4294901760
      %444 = vmatpush.msra.mxu0 %v443
      %v445 = vand.u32 %v177, 4294901760
      %v446 = vsub.f32 %v177, %v445
      %v447 = vand.u32 %v446, 4294901760
      %448 = vmatpush.msra.mxu0 %v447
      %v449 = vand.u32 %v176, 4294901760
      %v450 = vsub.f32 %v176, %v449
      %v451 = vand.u32 %v450, 4294901760
      %452 = vmatpush.msra.mxu0 %v451
      %v453 = vand.u32 %v175, 4294901760
      %v454 = vsub.f32 %v175, %v453
      %v455 = vand.u32 %v454, 4294901760
      %456 = vmatpush.msra.mxu0 %v455
      %v457 = vand.u32 %v174, 4294901760
      %v458 = vsub.f32 %v174, %v457
      %v459 = vand.u32 %v458, 4294901760
      %460 = vmatpush.msra.mxu0 %v459
      %v461 = vand.u32 %v173, 4294901760
      %v462 = vsub.f32 %v173, %v461
      %v463 = vand.u32 %v462, 4294901760
      %464 = vmatpush.msra.mxu0 %v463
      %v465 = vand.u32 %v172, 4294901760
      %v466 = vsub.f32 %v172, %v465
      %v467 = vand.u32 %v466, 4294901760
      %468 = vmatpush.msra.mxu0 %v467
      %v469 = vand.u32 %v171, 4294901760
      %v470 = vsub.f32 %v171, %v469
      %v471 = vand.u32 %v470, 4294901760
      %472 = vmatpush.msra.mxu0 %v471
      %v473 = vand.u32 %v170, 4294901760
      %v474 = vsub.f32 %v170, %v473
      %v475 = vand.u32 %v474, 4294901760
      %476 = vmatpush.msra.mxu0 %v475
      %v477 = vand.u32 %v169, 4294901760
      %v478 = vsub.f32 %v169, %v477
      %v479 = vand.u32 %v478, 4294901760
      %480 = vmatpush.msra.mxu0 %v479
      %v481 = vand.u32 %v168, 4294901760
      %v482 = vsub.f32 %v168, %v481
      %v483 = vand.u32 %v482, 4294901760
      %484 = vmatpush.msra.mxu0 %v483
      %v485 = vand.u32 %v167, 4294901760
      %486 = vmatmul.f32.gmra.mxu0 %v485
      %v487 = vpop.f32.mrf.mxu0
      %v488 = vadd.f32 %v419, %v487
      %489 = vdwg.mxu0
      %v490 = vand.u32 %v183, 4294901760
      %491 = vmatpush.msra.mxu0 %v490
      %v492 = vand.u32 %v182, 4294901760
      %493 = vmatpush.msra.mxu0 %v492
      %v494 = vand.u32 %v181, 4294901760
      %495 = vmatpush.msra.mxu0 %v494
      %v496 = vand.u32 %v180, 4294901760
      %497 = vmatpush.msra.mxu0 %v496
      %v498 = vand.u32 %v179, 4294901760
      %499 = vmatpush.msra.mxu0 %v498
      %v500 = vand.u32 %v178, 4294901760
      %501 = vmatpush.msra.mxu0 %v500
      %v502 = vand.u32 %v177, 4294901760
      %503 = vmatpush.msra.mxu0 %v502
      %v504 = vand.u32 %v176, 4294901760
      %505 = vmatpush.msra.mxu0 %v504
      %v506 = vand.u32 %v175, 4294901760
      %507 = vmatpush.msra.mxu0 %v506
      %v508 = vand.u32 %v174, 4294901760
      %509 = vmatpush.msra.mxu0 %v508
      %v510 = vand.u32 %v173, 4294901760
      %511 = vmatpush.msra.mxu0 %v510
      %v512 = vand.u32 %v172, 4294901760
      %513 = vmatpush.msra.mxu0 %v512
      %v514 = vand.u32 %v171, 4294901760
      %515 = vmatpush.msra.mxu0 %v514
      %v516 = vand.u32 %v170, 4294901760
      %517 = vmatpush.msra.mxu0 %v516
      %v518 = vand.u32 %v169, 4294901760
      %519 = vmatpush.msra.mxu0 %v518
      %v520 = vand.u32 %v168, 4294901760
      %521 = vmatpush.msra.mxu0 %v520
      %v522 = vand.u32 %v167, 4294901760
      %523 = vmatmul.f32.gmra.mxu0 %v522
      %v524 = vpop.f32.mrf.mxu0
      %v525 = vadd.f32 %v488, %v524
      %526 = vdwg.mxu0
      %v527 = vsub.f32 0.0, %v525
      %v528 = vmul.f32 %v527, 1.442695
      %v529 = vpow.pop %v528
      %v530 = vadd.f32 %v529, 1.0
      %v531 = vrcp.pop %v530
      %v532 = vmul.f32 %v530, %v531
      %v533 = vsub.f32 1.0, %v532
      %v534 = vmul.f32 %v531, %v533
      %v535 = vadd.f32 %v531, %v534
      %vm536 = vweird.f32 %v530
      %vm537 = vweird.f32 %v531
      %vm538 = vmor %vm536, %vm537
      %v539 = vsel %vm538, %v531, %v535
      %v540 = vand.u32 2147483647, %v530
      %vm541 = vcmp.eq.f32.partialorder %v540, 8.507059e+37
      %v542 = vand.u32 %v530, 2147483648
      %v543 = vor.u32 1.1754944e-38, %v542
      %v544 = vsel %vm541, %v543, %v539
      %v545 = vmul.f32 1.0, %v544
      %vm546 = vcmask 64512
      %547 = vst.msk [vmem:[%s166] sm:$0xff] %vm546, %v545
      %p548 = scmp.lt.s32.totalorder %s15, 1
      %s549 = scalar_select %p548, %s15, 1
      %s550 = smul.addr %s549, 8
      %s551 = scalar_lea.vmem %s3, %s550
      // Predicated region
      $region33: #{mlleaks_forward.1} parent=31 // pred_check
        %p552 = pneg %p101
      $region34: #{mlleaks_forward.1} parent=31 // pred_check_branch
        %554 = sbr.rel (%p552) target = $region36
      $region35: #{mlleaks_forward.1} parent=31 // pred_region
        _
      $region36: #{mlleaks_forward.1} parent=31 // pred_fallthru
        _
    $region32: #{mlleaks_forward.1} parent=5 // pred_fallthru
      _
    %p555 = scmp.le.s32.totalorder 2, %s10
    // Predicated region
    $region37: #{mlleaks_forward.1} parent=5 // pred_check
      %p556 = pneg %p555
    $region38: #{mlleaks_forward.1} parent=5 // pred_check_branch
      %558 = sbr.rel (%p556) target = $region40
    $region39: #{mlleaks_forward.1} parent=5 // pred_region
      %s559 = ssub.s32 %s10, 2
      // Predicated region
      $region41: #{mlleaks_forward.1} parent=39 // pred_check
        %p560 = pneg %p107
      $region42: #{mlleaks_forward.1} parent=39 // pred_check_branch
        %562 = sbr.rel (%p560) target = $region44
      $region43: #{mlleaks_forward.1} parent=39 // pred_region
        %p563 = scmp.lt.s32.totalorder %s16, 1
        %s564 = scalar_select %p563, %s16, 1
        %s565 = smul.addr %s564, 8
        %s566 = scalar_lea.vmem %s3, %s565
      $region44: #{mlleaks_forward.1} parent=39 // pred_fallthru
        _
    $region40: #{mlleaks_forward.1} parent=5 // pred_fallthru
      _
  $region6: #{mlleaks_forward.1} parent=0 // loop_footer
    %s14 = sadd.s32 1, %s10
  $region7: #{mlleaks_forward.1} parent=0 // loop_footer_branch
    %9 = sbr.rel target = $region3
  $region8: #{mlleaks_forward.1} parent=0 // loop_exit
    _

</llo_original>
